<compile_context>
chip_gen: v6e
topology: v6e:2x2x1
jax: 0.10.0
libtpu: 0.0.40
codegen_flags: <defaults>
</compile_context>

<pallas_src>
import functools

import jax
import jax.numpy as jnp
from jax.experimental import pallas as pl
from jax.experimental.pallas import tpu as pltpu

# ---- problem sizes (small, consistent with an NCHW conv input) -------------
N, CIN, H, W = 2, 4, 16, 16      # input  (N, CIN, H, W)
COUT, KH, KW = 8, 3, 3           # Conv2d(CIN, COUT, 3, padding=1)
PAD = 1
HP = H + 2 * PAD                 # padded height = 18
WPP = 32                         # padded width, rounded so WPP*CIN == 128 lanes
K_BLK = WPP * CIN                # 128  (per-kh contraction block, lane-dense)
N_COL = W * COUT                 # 128  (lane-dense output width)


def _conv_relu_kernel(xpad_ref, rhs_ref, b_ref, o_ref):
    """Fused conv-as-matmul + bias + ReLU, single invocation, all VMEM.

    xpad_ref: (N, HP, K_BLK)       padded NHWC input, (wp, cin) flattened to 128 lanes
    rhs_ref:  (KH, K_BLK, N_COL)   precomputed block-banded conv weights
    b_ref:    (1, N_COL)           bias tiled to the (w, cout) lane layout
    o_ref:    (N, H, N_COL)        lane-dense output (last dim = 128)
    """
    acc = jnp.zeros((N, H, N_COL), jnp.float32)
    for kh in range(KH):                                  # static unroll, 3 MXU pushes
        xk = xpad_ref[:, kh:kh + H, :]                    # (N, H, K_BLK) static window
        acc = acc + jax.lax.dot_general(
            xk, rhs_ref[kh],
            dimension_numbers=(((2,), (0,)), ((), ())),
            preferred_element_type=jnp.float32)
    o_ref[...] = jnp.maximum(acc + b_ref[...], 0.0)


def _build_banded_weights(weight):
    """(COUT, CIN, KH, KW) -> (KH, K_BLK, N_COL) block-banded matmul RHS.

    rhs[kh, wp*CIN + cin, w*COUT + c] =
        weight[c, cin, kh, wp - w]   if 0 <= wp - w < KW else 0
    Rows with wp >= W + 2*PAD are all-zero (lane padding of the contraction).
    """
    w_t = jnp.transpose(weight, (2, 3, 1, 0))                     # (KH, KW, CIN, COUT)
    kw_idx = jnp.arange(WPP)[:, None] - jnp.arange(W)[None, :]    # (WPP, W) = wp - w
    valid = (kw_idx >= 0) & (kw_idx < KW)
    kw_c = jnp.clip(kw_idx, 0, KW - 1)
    g = w_t[:, kw_c, :, :]                                        # (KH, WPP, W, CIN, COUT)
    g = jnp.where(valid[None, :, :, None, None], g, 0.0)
    g = jnp.transpose(g, (0, 1, 3, 2, 4))                         # (KH, WPP, CIN, W, COUT)
    return g.reshape(KH, K_BLK, N_COL)


def prepare_client_params(weight, bias):
    """One-time (parameter-load-time) weight/bias layout prep — NOT per call."""
    rhs = _build_banded_weights(weight)                           # (KH, 128, 128)
    b_tiled = jnp.tile(bias, W).reshape(1, N_COL)                 # (1, 128)
    return rhs, b_tiled


@functools.partial(jax.jit, static_argnames=("out_layout",))
def client_model_forward(x_nchw, rhs, b_tiled, *, out_layout="nhwc"):
    """x_nchw: (N, CIN, H, W) f32; rhs/b_tiled from prepare_client_params.

    Returns the client-side activation.  Default layout is lane-dense NHWC
    (what the server-side half consumes in split learning); pass
    out_layout="nchw" for strict parity with the PyTorch module's layout.
    """
    # --- wrapper-side layout plumbing only (transpose + one pad + reshape) ---
    x_nhwc = jnp.transpose(x_nchw, (0, 2, 3, 1))                        # (N, H, W, CIN)
    x_pad = jnp.pad(x_nhwc, ((0, 0), (PAD, PAD),
                             (PAD, WPP - W - PAD), (0, 0)))             # (N, HP, WPP, CIN)
    x_flat = x_pad.reshape(N, HP, K_BLK)                                # (N, 18, 128)

    out = pl.pallas_call(
        _conv_relu_kernel,
        out_shape=jax.ShapeDtypeStruct((N, H, N_COL), jnp.float32),
        in_specs=[
            pl.BlockSpec(memory_space=pltpu.MemorySpace.VMEM),
            pl.BlockSpec(memory_space=pltpu.MemorySpace.VMEM),
            pl.BlockSpec(memory_space=pltpu.MemorySpace.VMEM),
        ],
        out_specs=pl.BlockSpec(memory_space=pltpu.MemorySpace.VMEM),
        cost_estimate=pl.CostEstimate(
            flops=2 * KH * (N * H) * K_BLK * N_COL,
            transcendentals=0,
            bytes_accessed=4 * (N * HP * K_BLK + KH * K_BLK * N_COL
                                + N_COL + N * H * N_COL)),
    )(x_flat, rhs, b_tiled)

    out_nhwc = out.reshape(N, H, W, COUT)
    if out_layout == "nchw":
        return jnp.transpose(out_nhwc, (0, 3, 1, 2))
    return out_nhwc


def _reference(x_nchw, weight, bias):
    """Plain-JAX reference (same semantics as nn.Conv2d(pad=1) + ReLU)."""
    y = jax.lax.conv_general_dilated(
        x_nchw, weight, window_strides=(1, 1),
        padding=((PAD, PAD), (PAD, PAD)),
        dimension_numbers=("NCHW", "OIHW", "NCHW"))
    y = y + bias[None, :, None, None]
    return jnp.maximum(y, 0.0)


if __name__ == "__main__":
    key = jax.random.PRNGKey(0)
    kx, kw, kb = jax.random.split(key, 3)

    x = jax.random.normal(kx, (N, CIN, H, W), dtype=jnp.float32)
    # deterministic synthetic parameters (shapes per nn.Conv2d(CIN, COUT, 3))
    weight = jax.random.normal(kw, (COUT, CIN, KH, KW), dtype=jnp.float32) * 0.1
    bias = jax.random.normal(kb, (COUT,), dtype=jnp.float32) * 0.1

    # one-time prep (out of the per-forward hot path)
    rhs, b_tiled = jax.block_until_ready(prepare_client_params(weight, bias))

    # hot path: lane-dense NHWC activation (no trailing NCHW relayout)
    out_nhwc = jax.block_until_ready(client_model_forward(x, rhs, b_tiled))

    ref = jax.block_until_ready(_reference(x, weight, bias))
    assert out_nhwc.shape == (N, H, W, COUT)
    assert jnp.max(jnp.abs(jnp.transpose(out_nhwc, (0, 3, 1, 2)) - ref)) < 1e-4

    # strict module-parity path (NCHW output), checked once
    out_nchw = jax.block_until_ready(
        client_model_forward(x, rhs, b_tiled, out_layout="nchw"))
    assert out_nchw.shape == (N, COUT, H, W)
    assert jnp.max(jnp.abs(out_nchw - ref)) < 1e-4

    print("KERNEL_OK")
</pallas_src>

<mosaic_0001>
module attributes {stable_mosaic.version = 11 : i64} {
  func.func @_conv_relu_kernel(%arg0: memref<2x18x128xf32, #tpu.memory_space<vmem>>, %arg1: memref<3x128x128xf32, #tpu.memory_space<vmem>>, %arg2: memref<1x128xf32, #tpu.memory_space<vmem>>, %arg3: memref<2x16x128xf32, #tpu.memory_space<vmem>>) attributes {dimension_semantics = [], scalar_prefetch = 0 : i64, scratch_operands = 0 : i64, tpu.core_type = #tpu.core_type<tc>} {
    %cst = arith.constant 0.000000e+00 : f32
    %0 = vector.broadcast %cst : f32 to vector<2x16x128xf32>
    %c0 = arith.constant 0 : index
    %c0_0 = arith.constant 0 : index
    %c0_1 = arith.constant 0 : index
    %1 = vector.load %arg0[%c0, %c0_0, %c0_1] : memref<2x18x128xf32, #tpu.memory_space<vmem>>, vector<2x16x128xf32>
    %c0_2 = arith.constant 0 : index
    %c0_3 = arith.constant 0 : index
    %c0_4 = arith.constant 0 : index
    %2 = vector.load %arg1[%c0_2, %c0_3, %c0_4] : memref<3x128x128xf32, #tpu.memory_space<vmem>>, vector<1x128x128xf32>
    %3 = vector.shape_cast %2 : vector<1x128x128xf32> to vector<128x128xf32>
    %cst_5 = arith.constant dense<0.000000e+00> : vector<2x16x128xf32>
    %4 = tpu.matmul %1, %3, %cst_5 {dimension_numbers = #tpu.dot_dimension_numbers<[2], [0], [0, 1], [1], [0, 0, 0, 1, 1, 1], [], []>} : vector<2x16x128xf32>, vector<128x128xf32>, vector<2x16x128xf32> -> vector<2x16x128xf32>
    %5 = arith.addf %0, %4 : vector<2x16x128xf32>
    %c0_6 = arith.constant 0 : index
    %c1 = arith.constant 1 : index
    %c0_7 = arith.constant 0 : index
    %6 = vector.load %arg0[%c0_6, %c1, %c0_7] : memref<2x18x128xf32, #tpu.memory_space<vmem>>, vector<2x16x128xf32>
    %c1_8 = arith.constant 1 : index
    %c0_9 = arith.constant 0 : index
    %c0_10 = arith.constant 0 : index
    %7 = vector.load %arg1[%c1_8, %c0_9, %c0_10] : memref<3x128x128xf32, #tpu.memory_space<vmem>>, vector<1x128x128xf32>
    %8 = vector.shape_cast %7 : vector<1x128x128xf32> to vector<128x128xf32>
    %cst_11 = arith.constant dense<0.000000e+00> : vector<2x16x128xf32>
    %9 = tpu.matmul %6, %8, %cst_11 {dimension_numbers = #tpu.dot_dimension_numbers<[2], [0], [0, 1], [1], [0, 0, 0, 1, 1, 1], [], []>} : vector<2x16x128xf32>, vector<128x128xf32>, vector<2x16x128xf32> -> vector<2x16x128xf32>
    %10 = arith.addf %5, %9 : vector<2x16x128xf32>
    %c0_12 = arith.constant 0 : index
    %c2 = arith.constant 2 : index
    %c0_13 = arith.constant 0 : index
    %11 = vector.load %arg0[%c0_12, %c2, %c0_13] : memref<2x18x128xf32, #tpu.memory_space<vmem>>, vector<2x16x128xf32>
    %c2_14 = arith.constant 2 : index
    %c0_15 = arith.constant 0 : index
    %c0_16 = arith.constant 0 : index
    %12 = vector.load %arg1[%c2_14, %c0_15, %c0_16] : memref<3x128x128xf32, #tpu.memory_space<vmem>>, vector<1x128x128xf32>
    %13 = vector.shape_cast %12 : vector<1x128x128xf32> to vector<128x128xf32>
    %cst_17 = arith.constant dense<0.000000e+00> : vector<2x16x128xf32>
    %14 = tpu.matmul %11, %13, %cst_17 {dimension_numbers = #tpu.dot_dimension_numbers<[2], [0], [0, 1], [1], [0, 0, 0, 1, 1, 1], [], []>} : vector<2x16x128xf32>, vector<128x128xf32>, vector<2x16x128xf32> -> vector<2x16x128xf32>
    %15 = arith.addf %10, %14 : vector<2x16x128xf32>
    %c0_18 = arith.constant 0 : index
    %c0_19 = arith.constant 0 : index
    %16 = vector.load %arg2[%c0_18, %c0_19] : memref<1x128xf32, #tpu.memory_space<vmem>>, vector<1x128xf32>
    %17 = vector.shape_cast %16 : vector<1x128xf32> to vector<1x1x128xf32>
    %18 = vector.broadcast %17 : vector<1x1x128xf32> to vector<2x16x128xf32>
    %19 = arith.addf %15, %18 : vector<2x16x128xf32>
    %cst_20 = arith.constant 0.000000e+00 : f32
    %20 = vector.broadcast %cst_20 : f32 to vector<2x16x128xf32>
    %21 = arith.maximumf %19, %20 : vector<2x16x128xf32>
    %c0_21 = arith.constant 0 : index
    %c0_22 = arith.constant 0 : index
    %c0_23 = arith.constant 0 : index
    %22 = vector.load %arg3[%c0_21, %c0_22, %c0_23] : memref<2x16x128xf32, #tpu.memory_space<vmem>>, vector<2x16x128xf32>
    tpu.vector_store %arg3[%c0_21, %c0_22, %c0_23], %21 {strides = array<i32>} : memref<2x16x128xf32, #tpu.memory_space<vmem>>, vector<2x16x128xf32>,
    return
  }
}

</mosaic_0001>

<llo_original>
// kernel: client_model_forward.1
$region0: #{client_model_forward.1}
  #allocation0 [shape = 'u32[]', space=smem, size = 0x4, offset = 0x4, fixed_abs, tag = 'smem constant byte address 0x4 - core index']
  #allocation1 [shape = 'u32[144,128]{1,0:T(1,128)}', space=vmem, size = 0x12000, scoped, tag = 'internal scratch']
  %s0 = inlined_call_operand.vmem [shape: f32[2,18,128], index: 0, kind: input, shape index: {}]
  %s1 = inlined_call_operand.vmem [shape: f32[3,128,128], index: 1, kind: input, shape index: {}]
  %s2 = inlined_call_operand.vmem [shape: f32[1,128], index: 2, kind: input, shape index: {}]
  %s3 = inlined_call_operand.vmem [shape: f32[2,16,128], index: 3, kind: output, shape index: {}]
  %s4 = sld [smem:[#allocation0]]
  $region22: #{client_model_forward.1} parent=0
    _
  %s6 = ssub.s32 1, %s4
  %s7 = scalar_select 0, %s6, %s4
  // Predicated region
  $region2: #{client_model_forward.1} parent=0 // pred_check
    _
  $region3: #{client_model_forward.1} parent=0 // pred_check_branch
    %9 = sbr.rel (0) target = $region5
  $region4: #{client_model_forward.1} parent=0 // pred_region
    _
  $region5: #{client_model_forward.1} parent=0 // pred_fallthru
    _
  // Predicated region
  $region6: #{client_model_forward.1} parent=0 // pred_check
    _
  $region7: #{client_model_forward.1} parent=0 // pred_check_branch
    %11 = sbr.rel (0) target = $region9
  $region8: #{client_model_forward.1} parent=0 // pred_region
    _
  $region9: #{client_model_forward.1} parent=0 // pred_fallthru
    _
  // Predicated region
  $region10: #{client_model_forward.1} parent=0 // pred_check
    _
  $region11: #{client_model_forward.1} parent=0 // pred_check_branch
    %13 = sbr.rel (0) target = $region13
  $region12: #{client_model_forward.1} parent=0 // pred_region
    _
  $region13: #{client_model_forward.1} parent=0 // pred_fallthru
    _
  %v14 = vld [vmem:[%s0] sm:$0xff]
  %v15 = vld [vmem:[%s0 + $0x8] sm:$0xff]
  %v16 = vld [vmem:[%s0 + $0x18] sm:$0xff]
  %v17 = vld [vmem:[%s0 + $0x20] sm:$0xff]
  %v18 = vld [vmem:[%s1] sm:$0xff]
  %v19 = vld [vmem:[%s1 + $0x8] sm:$0xff]
  %v20 = vld [vmem:[%s1 + $0x10] sm:$0xff]
  %v21 = vld [vmem:[%s1 + $0x18] sm:$0xff]
  %v22 = vld [vmem:[%s1 + $0x20] sm:$0xff]
  %v23 = vld [vmem:[%s1 + $0x28] sm:$0xff]
  %v24 = vld [vmem:[%s1 + $0x30] sm:$0xff]
  %v25 = vld [vmem:[%s1 + $0x38] sm:$0xff]
  %v26 = vld [vmem:[%s1 + $0x40] sm:$0xff]
  %v27 = vld [vmem:[%s1 + $0x48] sm:$0xff]
  %v28 = vld [vmem:[%s1 + $0x50] sm:$0xff]
  %v29 = vld [vmem:[%s1 + $0x58] sm:$0xff]
  %v30 = vld [vmem:[%s1 + $0x60] sm:$0xff]
  %v31 = vld [vmem:[%s1 + $0x68] sm:$0xff]
  %v32 = vld [vmem:[%s1 + $0x70] sm:$0xff]
  %v33 = vld [vmem:[%s1 + $0x78] sm:$0xff]
  %v34 = vld [vmem:[%s0 + $0x1] sm:$0xff]
  %v35 = vld [vmem:[%s0 + $0x9] sm:$0xff]
  %v36 = vld [vmem:[%s0 + $0x19] sm:$0xff]
  %v37 = vld [vmem:[%s0 + $0x21] sm:$0xff]
  %s38 = scalar_lea.vmem %s1, 128
  %v39 = vld [vmem:[%s38] sm:$0xff]
  %v40 = vld [vmem:[%s38 + $0x8] sm:$0xff]
  %v41 = vld [vmem:[%s38 + $0x10] sm:$0xff]
  %v42 = vld [vmem:[%s38 + $0x18] sm:$0xff]
  %v43 = vld [vmem:[%s38 + $0x20] sm:$0xff]
  %v44 = vld [vmem:[%s38 + $0x28] sm:$0xff]
  %v45 = vld [vmem:[%s38 + $0x30] sm:$0xff]
  %v46 = vld [vmem:[%s38 + $0x38] sm:$0xff]
  %v47 = vld [vmem:[%s38 + $0x40] sm:$0xff]
  %v48 = vld [vmem:[%s38 + $0x48] sm:$0xff]
  %v49 = vld [vmem:[%s38 + $0x50] sm:$0xff]
  %v50 = vld [vmem:[%s38 + $0x58] sm:$0xff]
  %v51 = vld [vmem:[%s38 + $0x60] sm:$0xff]
  %v52 = vld [vmem:[%s38 + $0x68] sm:$0xff]
  %v53 = vld [vmem:[%s38 + $0x70] sm:$0xff]
  %v54 = vld [vmem:[%s38 + $0x78] sm:$0xff]
  %55 = vmatprep.subr.mxu0 0.0
  %56 = vmatpush1.msra.mxu0 %v54
  %57 = vmatprep.subr.mxu0 0.0
  %58 = vmatpush1.msra.mxu0 %v53
  %59 = vmatprep.subr.mxu0 0.0
  %60 = vmatpush1.msra.mxu0 %v52
  %61 = vmatprep.subr.mxu0 0.0
  %62 = vmatpush1.msra.mxu0 %v51
  %63 = vmatprep.subr.mxu0 0.0
  %64 = vmatpush1.msra.mxu0 %v50
  %65 = vmatprep.subr.mxu0 0.0
  %66 = vmatpush1.msra.mxu0 %v49
  %67 = vmatprep.subr.mxu0 0.0
  %68 = vmatpush1.msra.mxu0 %v48
  %69 = vmatprep.subr.mxu0 0.0
  %70 = vmatpush1.msra.mxu0 %v47
  %71 = vmatprep.subr.mxu0 0.0
  %72 = vmatpush1.msra.mxu0 %v46
  %73 = vmatprep.subr.mxu0 0.0
  %74 = vmatpush1.msra.mxu0 %v45
  %75 = vmatprep.subr.mxu0 0.0
  %76 = vmatpush1.msra.mxu0 %v44
  %77 = vmatprep.subr.mxu0 0.0
  %78 = vmatpush1.msra.mxu0 %v43
  %79 = vmatprep.subr.mxu0 0.0
  %80 = vmatpush1.msra.mxu0 %v42
  %81 = vmatprep.subr.mxu0 0.0
  %82 = vmatpush1.msra.mxu0 %v41
  %83 = vmatprep.subr.mxu0 0.0
  %84 = vmatpush1.msra.mxu0 %v40
  %85 = vmatprep.subr.mxu0 0.0
  %86 = vmatpush1.msra.mxu0 %v39
  %87 = vmatprep.subr.mxu0 0.0
  %88 = vmatpush2.msra.mxu0 0.0
  %89 = vmatprep.subr.mxu0 0.0
  %90 = vmatpush2.msra.mxu0 0.0
  %91 = vmatprep.subr.mxu0 0.0
  %92 = vmatpush2.msra.mxu0 0.0
  %93 = vmatprep.subr.mxu0 0.0
  %94 = vmatpush2.msra.mxu0 0.0
  %95 = vmatprep.subr.mxu0 0.0
  %96 = vmatpush2.msra.mxu0 0.0
  %97 = vmatprep.subr.mxu0 0.0
  %98 = vmatpush2.msra.mxu0 0.0
  %99 = vmatprep.subr.mxu0 0.0
  %100 = vmatpush2.msra.mxu0 0.0
  %101 = vmatprep.subr.mxu0 0.0
  %102 = vmatpush2.msra.mxu0 0.0
  %103 = vmatprep.subr.mxu0 0.0
  %104 = vmatpush2.msra.mxu0 0.0
  %105 = vmatprep.subr.mxu0 0.0
  %106 = vmatpush2.msra.mxu0 0.0
  %107 = vmatprep.subr.mxu0 0.0
  %108 = vmatpush2.msra.mxu0 0.0
  %109 = vmatprep.subr.mxu0 0.0
  %110 = vmatpush2.msra.mxu0 0.0
  %111 = vmatprep.subr.mxu0 0.0
  %112 = vmatpush2.msra.mxu0 0.0
  %113 = vmatprep.subr.mxu0 0.0
  %114 = vmatpush2.msra.mxu0 0.0
  %115 = vmatprep.subr.mxu0 0.0
  %116 = vmatpush2.msra.mxu0 0.0
  %117 = vmatprep.subr.mxu0 0.0
  %118 = vmatpush2.msra.mxu0 0.0
  %119 = vmatprep.mubr.f32.mxu0 0.0
  %120 = vmatmul.mubr.f32.gmra.mxu0 %v34
  %v121 = vpop.f32.mrf.mxu0
  %v122 = vadd.f32 0.0, %v121
  %v123 = vpop.f32.mrf.mxu0
  %124 = vmatprep.mubr.f32.mxu0 0.0
  %125 = vmatmul.mubr.f32.gmra.mxu0 %v35
  %v126 = vpop.f32.mrf.mxu0
  %v127 = vadd.f32 0.0, %v126
  %v128 = vpop.f32.mrf.mxu0
  %129 = vmatprep.mubr.f32.mxu0 0.0
  %130 = vmatmul.mubr.f32.gmra.mxu0 %v36
  %v131 = vpop.f32.mrf.mxu0
  %v132 = vadd.f32 0.0, %v131
  %v133 = vpop.f32.mrf.mxu0
  %134 = vmatprep.mubr.f32.mxu0 0.0
  %135 = vmatmul.mubr.f32.gmra.mxu0 %v37
  %v136 = vpop.f32.mrf.mxu0
  %v137 = vadd.f32 0.0, %v136
  %v138 = vpop.f32.mrf.mxu0
  %139 = vdwg.mxu0
  %140 = vmatprep.subr.mxu0 0.0
  %141 = vmatpush1.msra.mxu0 %v33
  %142 = vmatprep.subr.mxu0 0.0
  %143 = vmatpush1.msra.mxu0 %v32
  %144 = vmatprep.subr.mxu0 0.0
  %145 = vmatpush1.msra.mxu0 %v31
  %146 = vmatprep.subr.mxu0 0.0
  %147 = vmatpush1.msra.mxu0 %v30
  %148 = vmatprep.subr.mxu0 0.0
  %149 = vmatpush1.msra.mxu0 %v29
  %150 = vmatprep.subr.mxu0 0.0
  %151 = vmatpush1.msra.mxu0 %v28
  %152 = vmatprep.subr.mxu0 0.0
  %153 = vmatpush1.msra.mxu0 %v27
  %154 = vmatprep.subr.mxu0 0.0
  %155 = vmatpush1.msra.mxu0 %v26
  %156 = vmatprep.subr.mxu0 0.0
  %157 = vmatpush1.msra.mxu0 %v25
  %158 = vmatprep.subr.mxu0 0.0
  %159 = vmatpush1.msra.mxu0 %v24
  %160 = vmatprep.subr.mxu0 0.0
  %161 = vmatpush1.msra.mxu0 %v23
  %162 = vmatprep.subr.mxu0 0.0
  %163 = vmatpush1.msra.mxu0 %v22
  %164 = vmatprep.subr.mxu0 0.0
  %165 = vmatpush1.msra.mxu0 %v21
  %166 = vmatprep.subr.mxu0 0.0
  %167 = vmatpush1.msra.mxu0 %v20
  %168 = vmatprep.subr.mxu0 0.0
  %169 = vmatpush1.msra.mxu0 %v19
  %170 = vmatprep.subr.mxu0 0.0
  %171 = vmatpush1.msra.mxu0 %v18
  %172 = vmatprep.subr.mxu0 0.0
  %173 = vmatpush2.msra.mxu0 0.0
  %174 = vmatprep.subr.mxu0 0.0
  %175 = vmatpush2.msra.mxu0 0.0
  %176 = vmatprep.subr.mxu0 0.0
  %177 = vmatpush2.msra.mxu0 0.0
  %178 = vmatprep.subr.mxu0 0.0
  %179 = vmatpush2.msra.mxu0 0.0
  %180 = vmatprep.subr.mxu0 0.0
  %181 = vmatpush2.msra.mxu0 0.0
  %182 = vmatprep.subr.mxu0 0.0
  %183 = vmatpush2.msra.mxu0 0.0
  %184 = vmatprep.subr.mxu0 0.0
  %185 = vmatpush2.msra.mxu0 0.0
  %186 = vmatprep.subr.mxu0 0.0
  %187 = vmatpush2.msra.mxu0 0.0
  %188 = vmatprep.subr.mxu0 0.0
  %189 = vmatpush2.msra.mxu0 0.0
  %190 = vmatprep.subr.mxu0 0.0
  %191 = vmatpush2.msra.mxu0 0.0
  %192 = vmatprep.subr.mxu0 0.0
  %193 = vmatpush2.msra.mxu0 0.0
  %194 = vmatprep.subr.mxu0 0.0
  %195 = vmatpush2.msra.mxu0 0.0
  %196 = vmatprep.subr.mxu0 0.0
  %197 = vmatpush2.msra.mxu0 0.0
  %198 = vmatprep.subr.mxu0 0.0
  %199 = vmatpush2.msra.mxu0 0.0
  %200 = vmatprep.subr.mxu0 0.0
  %201 = vmatpush2.msra.mxu0 0.0
  %202 = vmatprep.subr.mxu0 0.0
  %203 = vmatpush2.msra.mxu0 0.0
  %204 = vmatprep.mubr.f32.mxu0 0.0
  %205 = vmatmul.mubr.f32.gmra.mxu0 %v14
  %v206 = vpop.f32.mrf.mxu0
  %v207 = vadd.f32 %v122, %v206
  %v208 = vpop.f32.mrf.mxu0
  %209 = vmatprep.mubr.f32.mxu0 0.0
  %210 = vmatmul.mubr.f32.gmra.mxu0 %v15
  %v211 = vpop.f32.mrf.mxu0
  %v212 = vadd.f32 %v127, %v211
  %v213 = vpop.f32.mrf.mxu0
  %214 = vmatprep.mubr.f32.mxu0 0.0
  %215 = vmatmul.mubr.f32.gmra.mxu0 %v16
  %v216 = vpop.f32.mrf.mxu0
  %v217 = vadd.f32 %v132, %v216
  %v218 = vpop.f32.mrf.mxu0
  %219 = vmatprep.mubr.f32.mxu0 0.0
  %220 = vmatmul.mubr.f32.gmra.mxu0 %v17
  %v221 = vpop.f32.mrf.mxu0
  %v222 = vadd.f32 %v137, %v221
  %v223 = vpop.f32.mrf.mxu0
  %224 = vdwg.mxu0
  %v225 = vld [vmem:[%s0 + $0x2] sm:$0xff]
  %v226 = vld [vmem:[%s0 + $0xa] sm:$0xff]
  %v227 = vld [vmem:[%s0 + $0x1a] sm:$0xff]
  %v228 = vld [vmem:[%s0 + $0x22] sm:$0xff]
  %s229 = scalar_lea.vmem %s1, 256
  %v230 = vld [vmem:[%s229] sm:$0xff]
  %v231 = vld [vmem:[%s229 + $0x8] sm:$0xff]
  %v232 = vld [vmem:[%s229 + $0x10] sm:$0xff]
  %v233 = vld [vmem:[%s229 + $0x18] sm:$0xff]
  %v234 = vld [vmem:[%s229 + $0x20] sm:$0xff]
  %v235 = vld [vmem:[%s229 + $0x28] sm:$0xff]
  %v236 = vld [vmem:[%s229 + $0x30] sm:$0xff]
  %v237 = vld [vmem:[%s229 + $0x38] sm:$0xff]
  %v238 = vld [vmem:[%s229 + $0x40] sm:$0xff]
  %v239 = vld [vmem:[%s229 + $0x48] sm:$0xff]
  %v240 = vld [vmem:[%s229 + $0x50] sm:$0xff]
  %v241 = vld [vmem:[%s229 + $0x58] sm:$0xff]
  %v242 = vld [vmem:[%s229 + $0x60] sm:$0xff]
  %v243 = vld [vmem:[%s229 + $0x68] sm:$0xff]
  %v244 = vld [vmem:[%s229 + $0x70] sm:$0xff]
  %v245 = vld [vmem:[%s229 + $0x78] sm:$0xff]
  %246 = vmatprep.subr.mxu0 0.0
  %247 = vmatpush1.msra.mxu0 %v245
  %248 = vmatprep.subr.mxu0 0.0
  %249 = vmatpush1.msra.mxu0 %v244
  %250 = vmatprep.subr.mxu0 0.0
  %251 = vmatpush1.msra.mxu0 %v243
  %252 = vmatprep.subr.mxu0 0.0
  %253 = vmatpush1.msra.mxu0 %v242
  %254 = vmatprep.subr.mxu0 0.0
  %255 = vmatpush1.msra.mxu0 %v241
  %256 = vmatprep.subr.mxu0 0.0
  %257 = vmatpush1.msra.mxu0 %v240
  %258 = vmatprep.subr.mxu0 0.0
  %259 = vmatpush1.msra.mxu0 %v239
  %260 = vmatprep.subr.mxu0 0.0
  %261 = vmatpush1.msra.mxu0 %v238
  %262 = vmatprep.subr.mxu0 0.0
  %263 = vmatpush1.msra.mxu0 %v237
  %264 = vmatprep.subr.mxu0 0.0
  %265 = vmatpush1.msra.mxu0 %v236
  %266 = vmatprep.subr.mxu0 0.0
  %267 = vmatpush1.msra.mxu0 %v235
  %268 = vmatprep.subr.mxu0 0.0
  %269 = vmatpush1.msra.mxu0 %v234
  %270 = vmatprep.subr.mxu0 0.0
  %271 = vmatpush1.msra.mxu0 %v233
  %272 = vmatprep.subr.mxu0 0.0
  %273 = vmatpush1.msra.mxu0 %v232
  %274 = vmatprep.subr.mxu0 0.0
  %275 = vmatpush1.msra.mxu0 %v231
  %276 = vmatprep.subr.mxu0 0.0
  %277 = vmatpush1.msra.mxu0 %v230
  %278 = vmatprep.subr.mxu0 0.0
  %279 = vmatpush2.msra.mxu0 0.0
  %280 = vmatprep.subr.mxu0 0.0
  %281 = vmatpush2.msra.mxu0 0.0
  %282 = vmatprep.subr.mxu0 0.0
  %283 = vmatpush2.msra.mxu0 0.0
  %284 = vmatprep.subr.mxu0 0.0
  %285 = vmatpush2.msra.mxu0 0.0
  %286 = vmatprep.subr.mxu0 0.0
  %287 = vmatpush2.msra.mxu0 0.0
  %288 = vmatprep.subr.mxu0 0.0
  %289 = vmatpush2.msra.mxu0 0.0
  %290 = vmatprep.subr.mxu0 0.0
  %291 = vmatpush2.msra.mxu0 0.0
  %292 = vmatprep.subr.mxu0 0.0
  %293 = vmatpush2.msra.mxu0 0.0
  %294 = vmatprep.subr.mxu0 0.0
  %295 = vmatpush2.msra.mxu0 0.0
  %296 = vmatprep.subr.mxu0 0.0
  %297 = vmatpush2.msra.mxu0 0.0
  %298 = vmatprep.subr.mxu0 0.0
  %299 = vmatpush2.msra.mxu0 0.0
  %300 = vmatprep.subr.mxu0 0.0
  %301 = vmatpush2.msra.mxu0 0.0
  %302 = vmatprep.subr.mxu0 0.0
  %303 = vmatpush2.msra.mxu0 0.0
  %304 = vmatprep.subr.mxu0 0.0
  %305 = vmatpush2.msra.mxu0 0.0
  %306 = vmatprep.subr.mxu0 0.0
  %307 = vmatpush2.msra.mxu0 0.0
  %308 = vmatprep.subr.mxu0 0.0
  %309 = vmatpush2.msra.mxu0 0.0
  %310 = vmatprep.mubr.f32.mxu0 0.0
  %311 = vmatmul.mubr.f32.gmra.mxu0 %v225
  %v312 = vpop.f32.mrf.mxu0
  %v313 = vadd.f32 0.0, %v312
  %v314 = vpop.f32.mrf.mxu0
  %315 = vmatprep.mubr.f32.mxu0 0.0
  %316 = vmatmul.mubr.f32.gmra.mxu0 %v226
  %v317 = vpop.f32.mrf.mxu0
  %v318 = vadd.f32 0.0, %v317
  %v319 = vpop.f32.mrf.mxu0
  %320 = vmatprep.mubr.f32.mxu0 0.0
  %321 = vmatmul.mubr.f32.gmra.mxu0 %v227
  %v322 = vpop.f32.mrf.mxu0
  %v323 = vadd.f32 0.0, %v322
  %v324 = vpop.f32.mrf.mxu0
  %325 = vmatprep.mubr.f32.mxu0 0.0
  %326 = vmatmul.mubr.f32.gmra.mxu0 %v228
  %v327 = vpop.f32.mrf.mxu0
  %v328 = vadd.f32 0.0, %v327
  %v329 = vpop.f32.mrf.mxu0
  %330 = vdwg.mxu0
  %v331 = vadd.f32 %v207, %v313
  %v332 = vadd.f32 %v212, %v318
  %v333 = vadd.f32 %v217, %v323
  %v334 = vadd.f32 %v222, %v328
  %v335 = vld [vmem:[%s2] sm:$0x1]
  %v337 = vlaneseq
  %v338 = vshrl.u32 %v337, 7
  %v339 = vsub.s32 0, %v338
  %v340 = vrot.slane %v335, %v339
  %v342 = vadd.f32 %v331, %v340
  %v343 = vadd.f32 %v332, %v340
  %v344 = vadd.f32 %v333, %v340
  %v345 = vadd.f32 %v334, %v340
  %v346 = vmax.f32 %v342, 0.0
  %v347 = vmax.f32 %v343, 0.0
  %v348 = vmax.f32 %v344, 0.0
  %v349 = vmax.f32 %v345, 0.0
  %350 = vst [vmem:[%s3] sm:$0xff] %v346
  %351 = vst [vmem:[%s3 + $0x8] sm:$0xff] %v347
  %352 = vst [vmem:[%s3 + $0x10] sm:$0xff] %v348
  %353 = vst [vmem:[%s3 + $0x18] sm:$0xff] %v349
  // Predicated region
  $region14: #{client_model_forward.1} parent=0 // pred_check
    _
  $region15: #{client_model_forward.1} parent=0 // pred_check_branch
    %355 = sbr.rel (0) target = $region17
  $region16: #{client_model_forward.1} parent=0 // pred_region
    _
  $region17: #{client_model_forward.1} parent=0 // pred_fallthru
    _
  // Predicated region
  $region18: #{client_model_forward.1} parent=0 // pred_check
    _
  $region19: #{client_model_forward.1} parent=0 // pred_check_branch
    %357 = sbr.rel (0) target = $region21
  $region20: #{client_model_forward.1} parent=0 // pred_region
    _
  $region21: #{client_model_forward.1} parent=0 // pred_fallthru
    _

</llo_original>
